<compile_context>
chip_gen: v6e
topology: v6e:2x2x1
jax: 0.10.0
libtpu: 0.0.40
codegen_flags: <defaults>
</compile_context>

<pallas_src>
import jax
import jax.numpy as jnp
from jax.experimental import pallas as pl
from jax.experimental.pallas import tpu as pltpu


def _round_up(n, m):
    return ((n + m - 1) // m) * m


def _mlp_kernel(x_ref, w1_ref, b1_ref, w2_ref, b2_ref, o_ref):
    # fc1: (TB, F) @ (F, H) -> f32 on the MXU; bias + ReLU in f32 on the VPU.
    h = jnp.dot(x_ref[...], w1_ref[...], preferred_element_type=jnp.float32)
    h = jnp.maximum(h + b1_ref[...], 0.0)
    # fc2: (TB, H) @ (H, P) -> f32; bias add; store at natural width P.
    out = jnp.dot(h, w2_ref[...], preferred_element_type=jnp.float32)
    o_ref[...] = (out + b2_ref[...]).astype(o_ref.dtype)


def prepare_params(w1, b1, w2, b2):
    """One-time parameter prep (hoisted out of the forward).

    Expects weights already in (in_features, out_features) layout, i.e. the
    TRANSPOSE of torch.nn.Linear.weight. Biases are reshaped to 2-D rows so the
    kernel broadcasts them over the batch without any per-call wrapper ops.
    """
    F, H = w1.shape
    P = w2.shape[1]
    return (jnp.asarray(w1, jnp.float32),
            jnp.asarray(b1, jnp.float32).reshape(1, H),
            jnp.asarray(w2, jnp.float32),
            jnp.asarray(b2, jnp.float32).reshape(1, P))


def place_prediction_forward(x, params, *, batch_tile=1024):
    """Forward of PlacePredictionModel: ReLU(x @ W1 + b1) @ W2 + b2.

    x: (B, F); params = prepare_params(w1, b1, w2, b2).
    """
    w1, b1_2d, w2, b2_2d = params
    B, F = x.shape
    H = w1.shape[1]
    P = w2.shape[1]

    # Batch tile: big enough to amortize the ~0.35us per-grid-step overhead,
    # but capped near B/2 for larger batches so grid >= 2 and v7x's second
    # TensorCore is not idle. f32 operands -> multiples of 8 (sublane) suffice.
    TB = min(batch_tile, _round_up(B, 8))
    if B > 16:
        TB = min(TB, _round_up(pl.cdiv(B, 2), 8))
    TB = max(TB, 8)
    B_pad = _round_up(B, TB)

    # Pad the batch only when needed (no-op at the common tile-aligned sizes).
    # Padded rows produce ReLU(b1) @ w2 + b2 garbage; they are sliced off below.
    if B_pad != B:
        x_in = jnp.zeros((B_pad, F), x.dtype).at[:B, :].set(x)
    else:
        x_in = x

    grid = (B_pad // TB,)

    flops = 2 * B_pad * (F * H + H * P) + B_pad * (2 * H + P)
    bytes_accessed = (B_pad * F * x.dtype.itemsize          # x read
                      + (F * H + H + H * P + P) * 4         # resident params
                      + B_pad * P * x.dtype.itemsize)       # output write
    cost = pl.CostEstimate(flops=flops, transcendentals=0,
                           bytes_accessed=bytes_accessed)

    out = pl.pallas_call(
        _mlp_kernel,
        out_shape=jax.ShapeDtypeStruct((B_pad, P), x.dtype),
        grid_spec=pltpu.PrefetchScalarGridSpec(
            num_scalar_prefetch=0,
            grid=grid,
            in_specs=[
                # Streaming batch tiles of x (last dim = full F, no lane pad).
                pl.BlockSpec((TB, F), lambda i: (i, 0)),
                # Weights / biases: same block every step -> resident in VMEM.
                pl.BlockSpec((F, H), lambda i: (0, 0)),
                pl.BlockSpec((1, H), lambda i: (0, 0)),
                pl.BlockSpec((H, P), lambda i: (0, 0)),
                pl.BlockSpec((1, P), lambda i: (0, 0)),
            ],
            out_specs=pl.BlockSpec((TB, P), lambda i: (i, 0)),
        ),
        compiler_params=pltpu.CompilerParams(
            dimension_semantics=("parallel",)),
        cost_estimate=cost,
    )(x_in, w1, b1_2d, w2, b2_2d)

    return out if B_pad == B else out[:B]


def init_params(key, num_task_sets, num_objects, num_places, hidden_size=64,
                dtype=jnp.float32):
    """Deterministic init matching nn.Linear shapes (weights pre-transposed)."""
    in_features = num_task_sets * num_objects
    k1, k2, k3, k4 = jax.random.split(key, 4)
    # nn.Linear default: U(-1/sqrt(fan_in), 1/sqrt(fan_in))
    bound1 = 1.0 / jnp.sqrt(in_features)
    bound2 = 1.0 / jnp.sqrt(hidden_size)
    w1 = jax.random.uniform(k1, (in_features, hidden_size), dtype,
                            minval=-bound1, maxval=bound1)
    b1 = jax.random.uniform(k2, (hidden_size,), dtype,
                            minval=-bound1, maxval=bound1)
    w2 = jax.random.uniform(k3, (hidden_size, num_places), dtype,
                            minval=-bound2, maxval=bound2)
    b2 = jax.random.uniform(k4, (num_places,), dtype,
                            minval=-bound2, maxval=bound2)
    return w1, b1, w2, b2


def _reference(x, w1, b1, w2, b2):
    return jnp.maximum(x @ w1 + b1, 0.0) @ w2 + b2


if __name__ == "__main__":
    # Small shapes consistent with the module: in_features = num_task_sets * num_objects.
    num_task_sets = 4
    num_objects = 8          # -> in_features = 32
    num_places = 16
    hidden_size = 32
    batch = 8

    key = jax.random.PRNGKey(0)
    k_x, k_p, k_x2 = jax.random.split(key, 3)
    x = jax.random.normal(k_x, (batch, num_task_sets * num_objects), jnp.float32)
    w1, b1, w2, b2 = init_params(k_p, num_task_sets, num_objects,
                                 num_places, hidden_size)
    params = prepare_params(w1, b1, w2, b2)   # one-time prep, hoisted

    out = place_prediction_forward(x, params)
    out = jax.block_until_ready(out)

    ref = _reference(x, w1, b1, w2, b2)
    assert out.shape == (batch, num_places)
    assert jnp.allclose(out, ref, atol=1e-2, rtol=1e-2)

    # Larger batch exercises grid > 1 (both v7x cores), batch padding + slice.
    x_big = jax.random.normal(k_x2, (300, num_task_sets * num_objects),
                              jnp.float32)
    out_big = jax.block_until_ready(place_prediction_forward(x_big, params))
    ref_big = _reference(x_big, w1, b1, w2, b2)
    assert out_big.shape == (300, num_places)
    assert jnp.allclose(out_big, ref_big, atol=1e-2, rtol=1e-2)

    print("KERNEL_OK")
</pallas_src>

<mosaic_0001>
module attributes {stable_mosaic.version = 11 : i64} {
  func.func @_mlp_kernel(%arg0: i32, %arg1: memref<8x32xf32, #tpu.memory_space<vmem>>, %arg2: memref<32x32xf32, #tpu.memory_space<vmem>>, %arg3: memref<1x32xf32, #tpu.memory_space<vmem>>, %arg4: memref<32x16xf32, #tpu.memory_space<vmem>>, %arg5: memref<1x16xf32, #tpu.memory_space<vmem>>, %arg6: memref<8x16xf32, #tpu.memory_space<vmem>>) attributes {dimension_semantics = [#tpu.dimension_semantics<parallel>], iteration_bounds = array<i64: 1>, scalar_prefetch = 0 : i64, scratch_operands = 0 : i64, tpu.core_type = #tpu.core_type<tc>, window_params = [{transform_indices = @transform_0, window_bounds = array<i64: 8, 32>}, {pipeline_mode = #tpu.pipeline_mode<synchronous>, transform_indices = @transform_1, window_bounds = array<i64: 32, 32>}, {pipeline_mode = #tpu.pipeline_mode<synchronous>, transform_indices = @transform_2, window_bounds = array<i64: 1, 32>}, {pipeline_mode = #tpu.pipeline_mode<synchronous>, transform_indices = @transform_3, window_bounds = array<i64: 32, 16>}, {pipeline_mode = #tpu.pipeline_mode<synchronous>, transform_indices = @transform_4, window_bounds = array<i64: 1, 16>}, {transform_indices = @transform_5, window_bounds = array<i64: 8, 16>}]} {
    %c0 = arith.constant 0 : index
    %c0_0 = arith.constant 0 : index
    %0 = vector.load %arg1[%c0, %c0_0] : memref<8x32xf32, #tpu.memory_space<vmem>>, vector<8x32xf32>
    %c0_1 = arith.constant 0 : index
    %c0_2 = arith.constant 0 : index
    %1 = vector.load %arg2[%c0_1, %c0_2] : memref<32x32xf32, #tpu.memory_space<vmem>>, vector<32x32xf32>
    %cst = arith.constant dense<0.000000e+00> : vector<8x32xf32>
    %2 = tpu.matmul %0, %1, %cst {dimension_numbers = #tpu.dot_dimension_numbers<[1], [0], [0], [1], [0, 0, 1, 1], [], []>} : vector<8x32xf32>, vector<32x32xf32>, vector<8x32xf32> -> vector<8x32xf32>
    %c0_3 = arith.constant 0 : index
    %c0_4 = arith.constant 0 : index
    %3 = vector.load %arg3[%c0_3, %c0_4] : memref<1x32xf32, #tpu.memory_space<vmem>>, vector<1x32xf32>
    %4 = vector.broadcast %3 : vector<1x32xf32> to vector<8x32xf32>
    %5 = arith.addf %2, %4 : vector<8x32xf32>
    %cst_5 = arith.constant 0.000000e+00 : f32
    %6 = vector.broadcast %cst_5 : f32 to vector<8x32xf32>
    %7 = arith.maximumf %5, %6 : vector<8x32xf32>
    %c0_6 = arith.constant 0 : index
    %c0_7 = arith.constant 0 : index
    %8 = vector.load %arg4[%c0_6, %c0_7] : memref<32x16xf32, #tpu.memory_space<vmem>>, vector<32x16xf32>
    %cst_8 = arith.constant dense<0.000000e+00> : vector<8x16xf32>
    %9 = tpu.matmul %7, %8, %cst_8 {dimension_numbers = #tpu.dot_dimension_numbers<[1], [0], [0], [1], [0, 0, 1, 1], [], []>} : vector<8x32xf32>, vector<32x16xf32>, vector<8x16xf32> -> vector<8x16xf32>
    %c0_9 = arith.constant 0 : index
    %c0_10 = arith.constant 0 : index
    %10 = vector.load %arg5[%c0_9, %c0_10] : memref<1x16xf32, #tpu.memory_space<vmem>>, vector<1x16xf32>
    %11 = vector.broadcast %10 : vector<1x16xf32> to vector<8x16xf32>
    %12 = arith.addf %9, %11 : vector<8x16xf32>
    %c0_11 = arith.constant 0 : index
    %c0_12 = arith.constant 0 : index
    %13 = vector.load %arg6[%c0_11, %c0_12] : memref<8x16xf32, #tpu.memory_space<vmem>>, vector<8x16xf32>
    tpu.vector_store %arg6[%c0_11, %c0_12], %12 {strides = array<i32>} : memref<8x16xf32, #tpu.memory_space<vmem>>, vector<8x16xf32>,
    return
  }
  func.func @transform_0(%arg0: i32) -> (i32, i32) {
    %c0_i32 = arith.constant 0 : i32
    %c0_i32_0 = arith.constant 0 : i32
    return %arg0, %c0_i32 : i32, i32
  }
  func.func @transform_1(%arg0: i32) -> (i32, i32) {
    %c0_i32 = arith.constant 0 : i32
    %c0_i32_0 = arith.constant 0 : i32
    %c0_i32_1 = arith.constant 0 : i32
    return %c0_i32, %c0_i32_0 : i32, i32
  }
  func.func @transform_2(%arg0: i32) -> (i32, i32) {
    %c0_i32 = arith.constant 0 : i32
    %c0_i32_0 = arith.constant 0 : i32
    %c0_i32_1 = arith.constant 0 : i32
    return %c0_i32, %c0_i32_0 : i32, i32
  }
  func.func @transform_3(%arg0: i32) -> (i32, i32) {
    %c0_i32 = arith.constant 0 : i32
    %c0_i32_0 = arith.constant 0 : i32
    %c0_i32_1 = arith.constant 0 : i32
    return %c0_i32, %c0_i32_0 : i32, i32
  }
  func.func @transform_4(%arg0: i32) -> (i32, i32) {
    %c0_i32 = arith.constant 0 : i32
    %c0_i32_0 = arith.constant 0 : i32
    %c0_i32_1 = arith.constant 0 : i32
    return %c0_i32, %c0_i32_0 : i32, i32
  }
  func.func @transform_5(%arg0: i32) -> (i32, i32) {
    %c0_i32 = arith.constant 0 : i32
    %c0_i32_0 = arith.constant 0 : i32
    return %arg0, %c0_i32 : i32, i32
  }
}

</mosaic_0001>

<llo_original>
// kernel: tpu_custom_call.1
$region0: #{tpu_custom_call.1}
  #allocation0 [shape = 'u32[]', space=smem, size = 0x4, offset = 0x4, fixed_abs, tag = 'smem constant byte address 0x4 - core index']
  #allocation1 [shape = 'u32[144,128]{1,0:T(1,128)}', space=vmem, size = 0x12000, scoped, tag = 'internal scratch']
  %s0 = inlined_call_operand.vmem [shape: f32[8,32], index: 0, kind: input, shape index: {}]
  %s1 = inlined_call_operand.vmem [shape: f32[32,32], index: 1, kind: input, shape index: {}]
  %s2 = inlined_call_operand.vmem [shape: f32[1,32], index: 2, kind: input, shape index: {}]
  %s3 = inlined_call_operand.vmem [shape: f32[32,16], index: 3, kind: input, shape index: {}]
  %s4 = inlined_call_operand.vmem [shape: f32[1,16], index: 4, kind: input, shape index: {}]
  %s5 = inlined_call_operand.hbm [shape: f32[8,16], index: 5, kind: output, shape index: {}]
  %s6 = sld [smem:[#allocation0]]
  $region30: #{tpu_custom_call.1} parent=0
    _
  %s8 = ssub.s32 1, %s6
  %s9 = scalar_select 0, %s8, %s6
  $region1: #{tpu_custom_call.1} parent=0
    #allocation2 [shape = 'u8[4096]{0}', space=vmem, size = 0x1000, scoped, tag = 'output window, operand 0, single buffered']
    #allocation3 [shape = 's32[1]{0}', space=sflag, size = 0x4, scoped, tag = 'scoped memory for tpu_custom_call.1']
    %10 = vsyncpa [#allocation3], 0
    // Predicated region
    $region2: #{tpu_custom_call.1} parent=1 // pred_check
      _
    $region3: #{tpu_custom_call.1} parent=1 // pred_check_branch
      %12 = sbr.rel (0) target = $region5
    $region4: #{tpu_custom_call.1} parent=1 // pred_region
      _
    $region5: #{tpu_custom_call.1} parent=1 // pred_fallthru
      _
    // Predicated region
    $region6: #{tpu_custom_call.1} parent=1 // pred_check
      _
    $region7: #{tpu_custom_call.1} parent=1 // pred_check_branch
      %14 = sbr.rel (0) target = $region9
    $region8: #{tpu_custom_call.1} parent=1 // pred_region
      _
    $region9: #{tpu_custom_call.1} parent=1 // pred_fallthru
      _
    // Predicated region
    $region10: #{tpu_custom_call.1} parent=1 // pred_check
      _
    $region11: #{tpu_custom_call.1} parent=1 // pred_check_branch
      %16 = sbr.rel (0) target = $region13
    $region12: #{tpu_custom_call.1} parent=1 // pred_region
      _
    $region13: #{tpu_custom_call.1} parent=1 // pred_fallthru
      _
    // Predicated region
    $region14: #{tpu_custom_call.1} parent=1 // pred_check
      _
    $region15: #{tpu_custom_call.1} parent=1 // pred_check_branch
      %18 = sbr.rel (0) target = $region17
    $region16: #{tpu_custom_call.1} parent=1 // pred_region
      _
    $region17: #{tpu_custom_call.1} parent=1 // pred_fallthru
      _
    // Predicated region
    $region18: #{tpu_custom_call.1} parent=1 // pred_check
      _
    $region19: #{tpu_custom_call.1} parent=1 // pred_check_branch
      %20 = sbr.rel (0) target = $region21
    $region20: #{tpu_custom_call.1} parent=1 // pred_region
      _
    $region21: #{tpu_custom_call.1} parent=1 // pred_fallthru
      _
    %v21 = vld [vmem:[%s0] sm:$0xff]
    %v22 = vld [vmem:[%s1] sm:$0xff]
    %v23 = vld [vmem:[%s1 + $0x8] sm:$0xff]
    %v24 = vld [vmem:[%s1 + $0x10] sm:$0xff]
    %v25 = vld [vmem:[%s1 + $0x18] sm:$0xff]
    %v26 = vld [vmem:[%s2] sm:$0x1]
    %v28 = vlaneseq
    %v29 = vshrl.u32 %v28, 7
    %v30 = vsub.s32 0, %v29
    %v31 = vrot.slane %v26, %v30
    %vm33 = vcmask 261120
    %v35 = vsel %vm33, %v21, 0
    %37 = vmatprep.subr.mxu0 0.0
    %38 = vmatpush1.msra.mxu0 0.0
    %39 = vmatprep.subr.mxu0 0.0
    %40 = vmatpush1.msra.mxu0 0.0
    %41 = vmatprep.subr.mxu0 0.0
    %42 = vmatpush1.msra.mxu0 0.0
    %43 = vmatprep.subr.mxu0 0.0
    %44 = vmatpush1.msra.mxu0 0.0
    %45 = vmatprep.subr.mxu0 0.0
    %46 = vmatpush1.msra.mxu0 0.0
    %47 = vmatprep.subr.mxu0 0.0
    %48 = vmatpush1.msra.mxu0 0.0
    %49 = vmatprep.subr.mxu0 0.0
    %50 = vmatpush1.msra.mxu0 0.0
    %51 = vmatprep.subr.mxu0 0.0
    %52 = vmatpush1.msra.mxu0 0.0
    %53 = vmatprep.subr.mxu0 0.0
    %54 = vmatpush1.msra.mxu0 0.0
    %55 = vmatprep.subr.mxu0 0.0
    %56 = vmatpush1.msra.mxu0 0.0
    %57 = vmatprep.subr.mxu0 0.0
    %58 = vmatpush1.msra.mxu0 0.0
    %59 = vmatprep.subr.mxu0 0.0
    %60 = vmatpush1.msra.mxu0 0.0
    %61 = vmatprep.subr.mxu0 0.0
    %62 = vmatpush1.msra.mxu0 %v25
    %63 = vmatprep.subr.mxu0 0.0
    %64 = vmatpush1.msra.mxu0 %v24
    %65 = vmatprep.subr.mxu0 0.0
    %66 = vmatpush1.msra.mxu0 %v23
    %67 = vmatprep.subr.mxu0 0.0
    %68 = vmatpush1.msra.mxu0 %v22
    %69 = vmatprep.subr.mxu0 0.0
    %70 = vmatpush2.msra.mxu0 0.0
    %71 = vmatprep.subr.mxu0 0.0
    %72 = vmatpush2.msra.mxu0 0.0
    %73 = vmatprep.subr.mxu0 0.0
    %74 = vmatpush2.msra.mxu0 0.0
    %75 = vmatprep.subr.mxu0 0.0
    %76 = vmatpush2.msra.mxu0 0.0
    %77 = vmatprep.subr.mxu0 0.0
    %78 = vmatpush2.msra.mxu0 0.0
    %79 = vmatprep.subr.mxu0 0.0
    %80 = vmatpush2.msra.mxu0 0.0
    %81 = vmatprep.subr.mxu0 0.0
    %82 = vmatpush2.msra.mxu0 0.0
    %83 = vmatprep.subr.mxu0 0.0
    %84 = vmatpush2.msra.mxu0 0.0
    %85 = vmatprep.subr.mxu0 0.0
    %86 = vmatpush2.msra.mxu0 0.0
    %87 = vmatprep.subr.mxu0 0.0
    %88 = vmatpush2.msra.mxu0 0.0
    %89 = vmatprep.subr.mxu0 0.0
    %90 = vmatpush2.msra.mxu0 0.0
    %91 = vmatprep.subr.mxu0 0.0
    %92 = vmatpush2.msra.mxu0 0.0
    %93 = vmatprep.subr.mxu0 0.0
    %94 = vmatpush2.msra.mxu0 0.0
    %95 = vmatprep.subr.mxu0 0.0
    %96 = vmatpush2.msra.mxu0 0.0
    %97 = vmatprep.subr.mxu0 0.0
    %98 = vmatpush2.msra.mxu0 0.0
    %99 = vmatprep.subr.mxu0 0.0
    %100 = vmatpush2.msra.mxu0 0.0
    %101 = vmatprep.mubr.f32.mxu0 0.0
    %102 = vmatmul.mubr.f32.gmra.mxu0 %v35
    %v103 = vpop.f32.mrf.mxu0
    %v104 = vadd.f32 %v31, %v103
    %v105 = vpop.f32.mrf.mxu0
    %106 = vdwg.mxu0
    %v107 = vmax.f32 %v104, 0.0
    %v108 = vld [vmem:[%s3] sm:$0xff]
    %v109 = vld [vmem:[%s3 + $0x8] sm:$0xff]
    %v110 = vld [vmem:[%s3 + $0x10] sm:$0xff]
    %v111 = vld [vmem:[%s3 + $0x18] sm:$0xff]
    %v112 = vld [vmem:[%s4] sm:$0x1]
    %v114 = vlaneseq
    %v115 = vshrl.u32 %v114, 7
    %v116 = vsub.s32 0, %v115
    %v117 = vrot.slane %v112, %v116
    %v120 = vsel %vm33, %v107, 0
    %122 = vmatprep.subr.mxu0 0.0
    %123 = vmatpush1.msra.mxu0 0.0
    %124 = vmatprep.subr.mxu0 0.0
    %125 = vmatpush1.msra.mxu0 0.0
    %126 = vmatprep.subr.mxu0 0.0
    %127 = vmatpush1.msra.mxu0 0.0
    %128 = vmatprep.subr.mxu0 0.0
    %129 = vmatpush1.msra.mxu0 0.0
    %130 = vmatprep.subr.mxu0 0.0
    %131 = vmatpush1.msra.mxu0 0.0
    %132 = vmatprep.subr.mxu0 0.0
    %133 = vmatpush1.msra.mxu0 0.0
    %134 = vmatprep.subr.mxu0 0.0
    %135 = vmatpush1.msra.mxu0 0.0
    %136 = vmatprep.subr.mxu0 0.0
    %137 = vmatpush1.msra.mxu0 0.0
    %138 = vmatprep.subr.mxu0 0.0
    %139 = vmatpush1.msra.mxu0 0.0
    %140 = vmatprep.subr.mxu0 0.0
    %141 = vmatpush1.msra.mxu0 0.0
    %142 = vmatprep.subr.mxu0 0.0
    %143 = vmatpush1.msra.mxu0 0.0
    %144 = vmatprep.subr.mxu0 0.0
    %145 = vmatpush1.msra.mxu0 0.0
    %146 = vmatprep.subr.mxu0 0.0
    %147 = vmatpush1.msra.mxu0 %v111
    %148 = vmatprep.subr.mxu0 0.0
    %149 = vmatpush1.msra.mxu0 %v110
    %150 = vmatprep.subr.mxu0 0.0
    %151 = vmatpush1.msra.mxu0 %v109
    %152 = vmatprep.subr.mxu0 0.0
    %153 = vmatpush1.msra.mxu0 %v108
    %154 = vmatprep.subr.mxu0 0.0
    %155 = vmatpush2.msra.mxu0 0.0
    %156 = vmatprep.subr.mxu0 0.0
    %157 = vmatpush2.msra.mxu0 0.0
    %158 = vmatprep.subr.mxu0 0.0
    %159 = vmatpush2.msra.mxu0 0.0
    %160 = vmatprep.subr.mxu0 0.0
    %161 = vmatpush2.msra.mxu0 0.0
    %162 = vmatprep.subr.mxu0 0.0
    %163 = vmatpush2.msra.mxu0 0.0
    %164 = vmatprep.subr.mxu0 0.0
    %165 = vmatpush2.msra.mxu0 0.0
    %166 = vmatprep.subr.mxu0 0.0
    %167 = vmatpush2.msra.mxu0 0.0
    %168 = vmatprep.subr.mxu0 0.0
    %169 = vmatpush2.msra.mxu0 0.0
    %170 = vmatprep.subr.mxu0 0.0
    %171 = vmatpush2.msra.mxu0 0.0
    %172 = vmatprep.subr.mxu0 0.0
    %173 = vmatpush2.msra.mxu0 0.0
    %174 = vmatprep.subr.mxu0 0.0
    %175 = vmatpush2.msra.mxu0 0.0
    %176 = vmatprep.subr.mxu0 0.0
    %177 = vmatpush2.msra.mxu0 0.0
    %178 = vmatprep.subr.mxu0 0.0
    %179 = vmatpush2.msra.mxu0 0.0
    %180 = vmatprep.subr.mxu0 0.0
    %181 = vmatpush2.msra.mxu0 0.0
    %182 = vmatprep.subr.mxu0 0.0
    %183 = vmatpush2.msra.mxu0 0.0
    %184 = vmatprep.subr.mxu0 0.0
    %185 = vmatpush2.msra.mxu0 0.0
    %186 = vmatprep.mubr.f32.mxu0 0.0
    %187 = vmatmul.mubr.f32.gmra.mxu0 %v120
    %v188 = vpop.f32.mrf.mxu0
    %v189 = vadd.f32 %v117, %v188
    %v190 = vpop.f32.mrf.mxu0
    %191 = vdwg.mxu0
    %vm192 = vcmask 130048
    %193 = vst.msk [vmem:[#allocation2] sm:$0xff] %vm192, %v189
    // Predicated region
    $region22: #{tpu_custom_call.1} parent=1 // pred_check
      _
    $region23: #{tpu_custom_call.1} parent=1 // pred_check_branch
      %195 = sbr.rel (0) target = $region25
    $region24: #{tpu_custom_call.1} parent=1 // pred_region
      %s197 = ssub.s32 128, 128
      %198 = vsyncadd [#allocation3], %s197
      %s200 = sshll.u32 [#allocation2], 4
      %s201 = int_to_ptr.vmem [resolvable:$true] %s200
      %203 = dma.vmem_to_hbm [thread:$0]  %s201, 128, %s5, [#allocation3]
    $region25: #{tpu_custom_call.1} parent=1 // pred_fallthru
      _
    // Predicated region
    $region26: #{tpu_custom_call.1} parent=1 // pred_check
      _
    $region27: #{tpu_custom_call.1} parent=1 // pred_check_branch
      %205 = sbr.rel (0) target = $region29
    $region28: #{tpu_custom_call.1} parent=1 // pred_region
      %206 = dma.done [#allocation3], 128
    $region29: #{tpu_custom_call.1} parent=1 // pred_fallthru
      _
    %207 = vsyncpa [#allocation3], 1

</llo_original>
